<compile_context>
chip_gen: v6e
topology: v6e:2x2x1
jax: 0.10.0
libtpu: 0.0.40
codegen_flags: <defaults>
</compile_context>

<pallas_src>
import functools

import jax
import jax.numpy as jnp
from jax import lax
from jax.experimental import pallas as pl
from jax.experimental.pallas import tpu as pltpu


# Plain Python ints (int32 two's-complement values) -> jaxpr literals, never
# captured array constants.
_GOLDEN = -1640531527   # 0x9E3779B9
_MIX1 = -2048144789     # 0x85EBCA6B
_MIX2 = -1028477387     # 0xC2B2AE35


def _fmix32(v):
    # murmur3 finalizer on int32; logical right shifts emulated with
    # arithmetic shift + mask (portable lowering, interpret-path only).
    v = v ^ ((v >> 16) & 0xFFFF)
    v = v * _MIX1
    v = v ^ ((v >> 13) & 0x7FFFF)
    v = v * _MIX2
    v = v ^ ((v >> 16) & 0xFFFF)
    return v


def _random_routing_kernel(seed_ref, gmat_ref, out_ref, *, use_hw_prng: bool):
    """Fill out_ref (tile_r, c) with per-group-normalized uniforms.

    Lanes are organized in consecutive groups of `group_pad` experts (one
    token per group); each group is normalized to sum to 1 over its real
    expert lanes (encoded in gmat_ref).
    """
    tile_r, c = out_ref.shape
    step = pl.program_id(0)

    if use_hw_prng:
        # Hardware PRNG: one stream per (seed, tile) pair -> independent
        # tiles, so the grid axis is legally "parallel".
        pltpu.prng_seed(seed_ref[0] ^ (step * _GOLDEN))
        bits = pltpu.prng_random_bits((tile_r, c))
        bits = pltpu.bitcast(bits, jnp.int32)
    else:
        # Portable counter-hash fallback (interpret / non-TPU backend only, so
        # its VALU cost is irrelevant).  Global element index -> independent
        # of tiling.
        row = lax.broadcasted_iota(jnp.int32, (tile_r, c), 0)
        col = lax.broadcasted_iota(jnp.int32, (tile_r, c), 1)
        idx = (step * tile_r + row) * c + col
        bits = _fmix32(idx * _GOLDEN + seed_ref[0])

    # Uniform [0, 1) from 24 bits (exact in float32).
    u = (bits & 0x00FFFFFF).astype(jnp.float32) * (1.0 / (1 << 24))

    # Grouped-lane (per-token) sums as one matmul against the resident
    # block-diagonal 0/1 matrix on the otherwise-idle MXU.
    denom = jnp.dot(u, gmat_ref[...], preferred_element_type=jnp.float32)
    denom = jnp.maximum(denom, 1e-20)   # NaN insurance (all-zero group draw)

    if use_hw_prng:
        out_ref[...] = u * pl.reciprocal(denom, approx=True)
    else:
        out_ref[...] = u / denom


def _round_up(x: int, m: int) -> int:
    return ((x + m - 1) // m) * m


def random_routing(x: jax.Array, num_moe: int, seed: int = 0) -> jax.Array:
    """Pallas implementation of Random.forward(x).

    Returns routing weights of shape (batch, seq, num_moe), float32,
    normalized to sum to 1 along the last axis.  Deterministic given `seed`
    (bit-exact reproducibility across backends/tile sizes is not guaranteed,
    matching torch.rand-style semantics).
    """
    batch, seq, _ = x.shape
    n_tokens = batch * seq
    seed_arr = jnp.asarray([seed], dtype=jnp.int32)

    # Lane-dense layout: pad each token's expert group to a power-of-two
    # divisor of 128 and fold tokens into the 128-lane axis so every store is
    # a full-width (unmasked) vst.
    if num_moe <= 128:
        group_pad = 1 << max(num_moe - 1, 0).bit_length()   # next pow2 >= num_moe
        group_pad = max(group_pad, 1)
        c = 128
        tok_per_row = c // group_pad
    else:
        # TODO(synk): num_moe > 128 keeps one token per row; last dim is
        # padded to a multiple of 128 (still lane-dense stores).
        group_pad = c = _round_up(num_moe, 128)
        tok_per_row = 1

    n_rows = pl.cdiv(n_tokens, tok_per_row)
    n_rows_pad = _round_up(n_rows, 8)

    # Big tiles to amortize the ~0.35 us per-step overhead, but keep >= 4 grid
    # steps where possible so v7x's two TensorCores both get work.
    target_tile_rows = 2048                      # 2048 * 128 * 4 B = 1 MB/step
    quarter = _round_up(pl.cdiv(n_rows_pad, 4), 8)
    tile_r = max(8, min(target_tile_rows, quarter))
    n_rows_final = _round_up(n_rows_pad, tile_r)
    grid = (n_rows_final // tile_r,)

    # Block-diagonal group-sum matrix, built once outside the kernel and kept
    # resident in VMEM (index_map always returns block (0, 0)).
    # gmat[i, j] = 1 iff lane i is a *real* expert lane in the same group as j.
    lane = jnp.arange(c, dtype=jnp.int32)
    same_group = (lane[:, None] // group_pad) == (lane[None, :] // group_pad)
    real_row = (lane[:, None] % group_pad) < num_moe
    gmat = (same_group & real_row).astype(jnp.float32)

    # Hardware PRNG only when actually compiling through Mosaic; the software
    # counter hash covers the interpret/CPU path.
    use_hw_prng = jax.default_backend() == "tpu"

    kernel = functools.partial(_random_routing_kernel, use_hw_prng=use_hw_prng)

    bytes_out = n_rows_final * c * 4
    cost = pl.CostEstimate(
        flops=2 * n_rows_final * c * c,      # the group-sum matmul
        transcendentals=0,
        bytes_accessed=bytes_out + c * c * 4,
    )

    out2d = pl.pallas_call(
        kernel,
        out_shape=jax.ShapeDtypeStruct((n_rows_final, c), jnp.float32),
        grid_spec=pltpu.PrefetchScalarGridSpec(
            num_scalar_prefetch=1,                          # seed -> SMEM
            grid=grid,
            in_specs=[pl.BlockSpec((c, c), lambda i, sref: (0, 0))],
            out_specs=pl.BlockSpec((tile_r, c), lambda i, sref: (i, 0)),
        ),
        compiler_params=pltpu.CompilerParams(
            dimension_semantics=("parallel",),
        ),
        cost_estimate=cost,
    )(seed_arr, gmat)

    # Fold lanes back into (tokens, experts).  When num_moe divides 128 this
    # is a pure (free) reshape; otherwise the padded expert lanes are sliced
    # off (extra copy accepted for the fallback layout).
    flat = out2d.reshape(n_rows_final * tok_per_row, group_pad)
    if group_pad != num_moe:
        flat = flat[:, :num_moe]
    if flat.shape[0] != n_tokens:
        flat = flat[:n_tokens]
    return flat.reshape(batch, seq, num_moe)


if __name__ == "__main__":
    # Small shapes consistent with the module's forward contract.
    batch, seq, dim, num_moe = 2, 8, 32, 8

    key = jax.random.PRNGKey(0)
    x = jax.random.normal(key, (batch, seq, dim), dtype=jnp.float32)

    routing_weights = random_routing(x, num_moe=num_moe, seed=0)
    routing_weights = jax.block_until_ready(routing_weights)

    # Sanity checks: shape/dtype, values in [0, 1], rows sum to ~1.
    assert routing_weights.shape == (batch, seq, num_moe)
    assert routing_weights.dtype == jnp.float32
    row_sums = jnp.sum(routing_weights, axis=-1)
    assert jnp.allclose(row_sums, jnp.ones_like(row_sums), atol=2e-3)
    assert bool(jnp.all(routing_weights >= 0.0))
    assert bool(jnp.all(routing_weights <= 1.0 + 1e-5))
    # Randomness is actually non-degenerate.
    assert float(jnp.std(routing_weights)) > 0.0

    print("KERNEL_OK")
</pallas_src>

<mosaic_0001>
module attributes {stable_mosaic.version = 11 : i64} {
  func.func @_random_routing_kernel(%arg0: i32, %arg1: memref<1xi32, #tpu.memory_space<smem>>, %arg2: memref<128x128xf32, #tpu.memory_space<vmem>>, %arg3: memref<8x128xf32, #tpu.memory_space<vmem>>) attributes {dimension_semantics = [#tpu.dimension_semantics<parallel>], iteration_bounds = array<i64: 1>, scalar_prefetch = 1 : i64, scratch_operands = 0 : i64, tpu.core_type = #tpu.core_type<tc>, window_params = [{pipeline_mode = #tpu.pipeline_mode<synchronous>, transform_indices = @transform_0, window_bounds = array<i64: 128, 128>}, {transform_indices = @transform_1, window_bounds = array<i64: 8, 128>}]} {
    %0 = tpu.iota {dimensions = array<i32: 0>} : vector<8x128xi32>
    %1 = tpu.iota {dimensions = array<i32: 1>} : vector<8x128xi32>
    %c8_i32 = arith.constant 8 : i32
    %2 = arith.muli %arg0, %c8_i32 : i32
    %3 = vector.broadcast %2 : i32 to vector<8x128xi32>
    %4 = arith.addi %3, %0 : vector<8x128xi32>
    %c128_i32 = arith.constant 128 : i32
    %5 = vector.broadcast %c128_i32 : i32 to vector<8x128xi32>
    %6 = arith.muli %4, %5 : vector<8x128xi32>
    %7 = arith.addi %6, %1 : vector<8x128xi32>
    %c-1640531527_i32 = arith.constant -1640531527 : i32
    %8 = vector.broadcast %c-1640531527_i32 : i32 to vector<8x128xi32>
    %9 = arith.muli %7, %8 : vector<8x128xi32>
    %c0 = arith.constant 0 : index
    %10 = memref.load %arg1[%c0] : memref<1xi32, #tpu.memory_space<smem>>
    %11 = vector.broadcast %10 : i32 to vector<8x128xi32>
    %12 = arith.addi %9, %11 : vector<8x128xi32>
    %c16_i32 = arith.constant 16 : i32
    %13 = vector.broadcast %c16_i32 : i32 to vector<8x128xi32>
    %14 = arith.shrsi %12, %13 : vector<8x128xi32>
    %c65535_i32 = arith.constant 65535 : i32
    %15 = vector.broadcast %c65535_i32 : i32 to vector<8x128xi32>
    %16 = arith.andi %14, %15 : vector<8x128xi32>
    %17 = arith.xori %12, %16 : vector<8x128xi32>
    %c-2048144789_i32 = arith.constant -2048144789 : i32
    %18 = vector.broadcast %c-2048144789_i32 : i32 to vector<8x128xi32>
    %19 = arith.muli %17, %18 : vector<8x128xi32>
    %c13_i32 = arith.constant 13 : i32
    %20 = vector.broadcast %c13_i32 : i32 to vector<8x128xi32>
    %21 = arith.shrsi %19, %20 : vector<8x128xi32>
    %c524287_i32 = arith.constant 524287 : i32
    %22 = vector.broadcast %c524287_i32 : i32 to vector<8x128xi32>
    %23 = arith.andi %21, %22 : vector<8x128xi32>
    %24 = arith.xori %19, %23 : vector<8x128xi32>
    %c-1028477387_i32 = arith.constant -1028477387 : i32
    %25 = vector.broadcast %c-1028477387_i32 : i32 to vector<8x128xi32>
    %26 = arith.muli %24, %25 : vector<8x128xi32>
    %c16_i32_0 = arith.constant 16 : i32
    %27 = vector.broadcast %c16_i32_0 : i32 to vector<8x128xi32>
    %28 = arith.shrsi %26, %27 : vector<8x128xi32>
    %c65535_i32_1 = arith.constant 65535 : i32
    %29 = vector.broadcast %c65535_i32_1 : i32 to vector<8x128xi32>
    %30 = arith.andi %28, %29 : vector<8x128xi32>
    %31 = arith.xori %26, %30 : vector<8x128xi32>
    %c16777215_i32 = arith.constant 16777215 : i32
    %32 = vector.broadcast %c16777215_i32 : i32 to vector<8x128xi32>
    %33 = arith.andi %31, %32 : vector<8x128xi32>
    %34 = arith.sitofp %33 : vector<8x128xi32> to vector<8x128xf32>
    %cst = arith.constant 5.96046448E-8 : f32
    %35 = vector.broadcast %cst : f32 to vector<8x128xf32>
    %36 = arith.mulf %34, %35 : vector<8x128xf32>
    %c0_2 = arith.constant 0 : index
    %c0_3 = arith.constant 0 : index
    %37 = vector.load %arg2[%c0_2, %c0_3] : memref<128x128xf32, #tpu.memory_space<vmem>>, vector<128x128xf32>
    %cst_4 = arith.constant dense<0.000000e+00> : vector<8x128xf32>
    %38 = tpu.matmul %36, %37, %cst_4 {dimension_numbers = #tpu.dot_dimension_numbers<[1], [0], [0], [1], [0, 0, 1, 1], [], []>} : vector<8x128xf32>, vector<128x128xf32>, vector<8x128xf32> -> vector<8x128xf32>
    %cst_5 = arith.constant 9.99999968E-21 : f32
    %39 = vector.broadcast %cst_5 : f32 to vector<8x128xf32>
    %40 = arith.maximumf %38, %39 : vector<8x128xf32>
    %41 = arith.divf %36, %40 : vector<8x128xf32>
    %c0_6 = arith.constant 0 : index
    %c0_7 = arith.constant 0 : index
    %42 = vector.load %arg3[%c0_6, %c0_7] : memref<8x128xf32, #tpu.memory_space<vmem>>, vector<8x128xf32>
    tpu.vector_store %arg3[%c0_6, %c0_7], %41 {strides = array<i32>} : memref<8x128xf32, #tpu.memory_space<vmem>>, vector<8x128xf32>,
    return
  }
  func.func @transform_0(%arg0: i32, %arg1: memref<1xi32, #tpu.memory_space<smem>>) -> (i32, i32) {
    %c0_i32 = arith.constant 0 : i32
    %c0_i32_0 = arith.constant 0 : i32
    %c0_i32_1 = arith.constant 0 : i32
    return %c0_i32, %c0_i32_0 : i32, i32
  }
  func.func @transform_1(%arg0: i32, %arg1: memref<1xi32, #tpu.memory_space<smem>>) -> (i32, i32) {
    %c0_i32 = arith.constant 0 : i32
    %c0_i32_0 = arith.constant 0 : i32
    return %arg0, %c0_i32 : i32, i32
  }
}

</mosaic_0001>

<llo_original>
// kernel: tpu_custom_call.1
$region0: #{tpu_custom_call.1}
  #allocation0 [shape = 'u32[]', space=smem, size = 0x4, offset = 0x4, fixed_abs, tag = 'smem constant byte address 0x4 - core index']
  #allocation1 [shape = 'u32[144,128]{1,0:T(1,128)}', space=vmem, size = 0x12000, scoped, tag = 'internal scratch']
  #allocation2 [shape = 's32[1]{0}', space=sflag, size = 0x4, scoped, tag = 'scoped memory for tpu_custom_call.1']
  #allocation3 [shape = 's32[1]{0:T(128)S(6)}', space=smem, size = 0x200, scoped, tag = 'prefetched SMEM operand 0']
  %s0 = inlined_call_operand.<no memory space> [shape: s32[1], index: 0, kind: input, shape index: {}]
  %s1 = inlined_call_operand.hbm [shape: f32[128,128], index: 1, kind: input, shape index: {}]
  %s2 = inlined_call_operand.hbm [shape: f32[8,128], index: 2, kind: output, shape index: {}]
  %s3 = sld [smem:[#allocation0]]
  $region18: #{tpu_custom_call.1} parent=0
    _
  %s5 = ssub.s32 1, %s3
  %s6 = scalar_select 0, %s5, %s3
  %7 = sst [smem:[#allocation3]] %s0
  $region1: #{tpu_custom_call.1} parent=0
    #allocation4 [shape = 'u8[65536]{0}', space=vmem, size = 0x10000, scoped, tag = 'input window, operand 1, single buffered']
    #allocation5 [shape = 's32[1]{0}', space=sflag, size = 0x4, scoped, tag = 'scoped memory for tpu_custom_call.1']
    #allocation6 [shape = 's32[1]{0}', space=sflag, size = 0x4, scoped, tag = 'scoped memory for tpu_custom_call.1']
    #allocation7 [shape = 'u8[4096]{0}', space=vmem, size = 0x1000, scoped, tag = 'output window, operand 0, single buffered']
    %8 = vsyncpa [#allocation5], 0
    %9 = vsyncpa [#allocation6], 0
    // Predicated region
    $region2: #{tpu_custom_call.1} parent=1 // pred_check
      _
    $region3: #{tpu_custom_call.1} parent=1 // pred_check_branch
      %11 = sbr.rel (0) target = $region5
    $region4: #{tpu_custom_call.1} parent=1 // pred_region
      %s13 = ssub.s32 2048, 2048
      %14 = vsyncadd [#allocation5], %s13
      %s15 = sshll.u32 [#allocation4], 4
      %s16 = int_to_ptr.vmem [resolvable:$true] %s15
      %21 = dma.hbm_to_vmem [thread:$0]  %s1, 2048, %s16, [#allocation5], 128, 128, 8
    $region5: #{tpu_custom_call.1} parent=1 // pred_fallthru
      _
    // Predicated region
    $region6: #{tpu_custom_call.1} parent=1 // pred_check
      _
    $region7: #{tpu_custom_call.1} parent=1 // pred_check_branch
      %23 = sbr.rel (0) target = $region9
    $region8: #{tpu_custom_call.1} parent=1 // pred_region
      %24 = dma.done [#allocation5], 2048
    $region9: #{tpu_custom_call.1} parent=1 // pred_fallthru
      _
    %v25 = vlaneseq
    %v26 = vshrl.u32 %v25, 7
    %v27 = vlaneseq
    %v28 = vand.u32 %v27, 127
    %s29 = smul.u32 0, 8
    %v30 = vstv %s29
    %v31 = vadd.s32 %v30, %v26
    %v32 = vmul.u32 %v31, 128
    %v33 = vadd.s32 %v32, %v28
    %v34 = vmul.u32 %v33, 2654435769
    %s35 = sld [smem:[#allocation3]]
    %v36 = vstv %s35
    %v37 = vadd.s32 %v34, %v36
    %v38 = vshra.s32 %v37, 16
    %v39 = vand.u32 %v38, 65535
    %v40 = vxor.u32 %v37, %v39
    %v41 = vmul.u32 %v40, 2246822507
    %v42 = vshra.s32 %v41, 13
    %v43 = vand.u32 %v42, 524287
    %v44 = vxor.u32 %v41, %v43
    %v45 = vmul.u32 %v44, 3266489909
    %v46 = vshra.s32 %v45, 16
    %v47 = vand.u32 %v46, 65535
    %v48 = vxor.u32 %v45, %v47
    %v49 = vand.u32 %v48, 16777215
    %v50 = vcvt.s32.f32 %v49
    %v51 = vmul.f32 %v50, 5.9604645e-08
    %v52 = vld [vmem:[#allocation4] sm:$0xff]
    %v53 = vld [vmem:[#allocation4 + $0x8] sm:$0xff]
    %v54 = vld [vmem:[#allocation4 + $0x10] sm:$0xff]
    %v55 = vld [vmem:[#allocation4 + $0x18] sm:$0xff]
    %v56 = vld [vmem:[#allocation4 + $0x20] sm:$0xff]
    %v57 = vld [vmem:[#allocation4 + $0x28] sm:$0xff]
    %v58 = vld [vmem:[#allocation4 + $0x30] sm:$0xff]
    %v59 = vld [vmem:[#allocation4 + $0x38] sm:$0xff]
    %v60 = vld [vmem:[#allocation4 + $0x40] sm:$0xff]
    %v61 = vld [vmem:[#allocation4 + $0x48] sm:$0xff]
    %v62 = vld [vmem:[#allocation4 + $0x50] sm:$0xff]
    %v63 = vld [vmem:[#allocation4 + $0x58] sm:$0xff]
    %v64 = vld [vmem:[#allocation4 + $0x60] sm:$0xff]
    %v65 = vld [vmem:[#allocation4 + $0x68] sm:$0xff]
    %v66 = vld [vmem:[#allocation4 + $0x70] sm:$0xff]
    %v67 = vld [vmem:[#allocation4 + $0x78] sm:$0xff]
    %68 = vmatprep.subr.mxu0 0.0
    %69 = vmatpush1.msra.mxu0 %v67
    %70 = vmatprep.subr.mxu0 0.0
    %71 = vmatpush1.msra.mxu0 %v66
    %72 = vmatprep.subr.mxu0 0.0
    %73 = vmatpush1.msra.mxu0 %v65
    %74 = vmatprep.subr.mxu0 0.0
    %75 = vmatpush1.msra.mxu0 %v64
    %76 = vmatprep.subr.mxu0 0.0
    %77 = vmatpush1.msra.mxu0 %v63
    %78 = vmatprep.subr.mxu0 0.0
    %79 = vmatpush1.msra.mxu0 %v62
    %80 = vmatprep.subr.mxu0 0.0
    %81 = vmatpush1.msra.mxu0 %v61
    %82 = vmatprep.subr.mxu0 0.0
    %83 = vmatpush1.msra.mxu0 %v60
    %84 = vmatprep.subr.mxu0 0.0
    %85 = vmatpush1.msra.mxu0 %v59
    %86 = vmatprep.subr.mxu0 0.0
    %87 = vmatpush1.msra.mxu0 %v58
    %88 = vmatprep.subr.mxu0 0.0
    %89 = vmatpush1.msra.mxu0 %v57
    %90 = vmatprep.subr.mxu0 0.0
    %91 = vmatpush1.msra.mxu0 %v56
    %92 = vmatprep.subr.mxu0 0.0
    %93 = vmatpush1.msra.mxu0 %v55
    %94 = vmatprep.subr.mxu0 0.0
    %95 = vmatpush1.msra.mxu0 %v54
    %96 = vmatprep.subr.mxu0 0.0
    %97 = vmatpush1.msra.mxu0 %v53
    %98 = vmatprep.subr.mxu0 0.0
    %99 = vmatpush1.msra.mxu0 %v52
    %100 = vmatprep.subr.mxu0 0.0
    %101 = vmatpush2.msra.mxu0 0.0
    %102 = vmatprep.subr.mxu0 0.0
    %103 = vmatpush2.msra.mxu0 0.0
    %104 = vmatprep.subr.mxu0 0.0
    %105 = vmatpush2.msra.mxu0 0.0
    %106 = vmatprep.subr.mxu0 0.0
    %107 = vmatpush2.msra.mxu0 0.0
    %108 = vmatprep.subr.mxu0 0.0
    %109 = vmatpush2.msra.mxu0 0.0
    %110 = vmatprep.subr.mxu0 0.0
    %111 = vmatpush2.msra.mxu0 0.0
    %112 = vmatprep.subr.mxu0 0.0
    %113 = vmatpush2.msra.mxu0 0.0
    %114 = vmatprep.subr.mxu0 0.0
    %115 = vmatpush2.msra.mxu0 0.0
    %116 = vmatprep.subr.mxu0 0.0
    %117 = vmatpush2.msra.mxu0 0.0
    %118 = vmatprep.subr.mxu0 0.0
    %119 = vmatpush2.msra.mxu0 0.0
    %120 = vmatprep.subr.mxu0 0.0
    %121 = vmatpush2.msra.mxu0 0.0
    %122 = vmatprep.subr.mxu0 0.0
    %123 = vmatpush2.msra.mxu0 0.0
    %124 = vmatprep.subr.mxu0 0.0
    %125 = vmatpush2.msra.mxu0 0.0
    %126 = vmatprep.subr.mxu0 0.0
    %127 = vmatpush2.msra.mxu0 0.0
    %128 = vmatprep.subr.mxu0 0.0
    %129 = vmatpush2.msra.mxu0 0.0
    %130 = vmatprep.subr.mxu0 0.0
    %131 = vmatpush2.msra.mxu0 0.0
    %132 = vmatprep.mubr.f32.mxu0 0.0
    %133 = vmatmul.mubr.f32.gmra.mxu0 %v51
    %v134 = vpop.f32.mrf.mxu0
    %v135 = vadd.f32 0.0, %v134
    %v136 = vpop.f32.mrf.mxu0
    %137 = vdwg.mxu0
    %v138 = vmax.f32 %v135, 1e-20
    %v139 = vrcp.pop %v138
    %v140 = vmul.f32 %v51, %v139
    %141 = vst [vmem:[#allocation7] sm:$0xff] %v140
    // Predicated region
    $region10: #{tpu_custom_call.1} parent=1 // pred_check
      _
    $region11: #{tpu_custom_call.1} parent=1 // pred_check_branch
      %143 = sbr.rel (0) target = $region13
    $region12: #{tpu_custom_call.1} parent=1 // pred_region
      %s145 = ssub.s32 128, 128
      %146 = vsyncadd [#allocation6], %s145
      %s148 = sshll.u32 [#allocation7], 4
      %s149 = int_to_ptr.vmem [resolvable:$true] %s148
      %151 = dma.vmem_to_hbm [thread:$0]  %s149, 128, %s2, [#allocation6]
    $region13: #{tpu_custom_call.1} parent=1 // pred_fallthru
      _
    // Predicated region
    $region14: #{tpu_custom_call.1} parent=1 // pred_check
      _
    $region15: #{tpu_custom_call.1} parent=1 // pred_check_branch
      %153 = sbr.rel (0) target = $region17
    $region16: #{tpu_custom_call.1} parent=1 // pred_region
      %154 = dma.done [#allocation6], 128
    $region17: #{tpu_custom_call.1} parent=1 // pred_fallthru
      _
    %155 = vsyncpa [#allocation5], 1
    %156 = vsyncpa [#allocation6], 1

</llo_original>
